<compile_context>
chip_gen: v6e
topology: v6e:2x2x1
jax: 0.10.0
libtpu: 0.0.40
codegen_flags: <defaults>
</compile_context>

<pallas_src>
import functools

import jax
import jax.numpy as jnp
from jax import lax
from jax.experimental import pallas as pl
from jax.experimental.pallas import tpu as pltpu


# ----------------------------------------------------------------------------- helpers
def _round_up(x, m):
    return ((x + m - 1) // m) * m


def _pick_tile(n_pad, cap):
    """Largest multiple of 128 <= cap that divides n_pad (n_pad is a 128-multiple)."""
    t = min(cap, n_pad)
    t = max((t // 128) * 128, 128)
    while n_pad % t:
        t -= 128
    return t


def _agg_tiles(n_pad):
    """Aggregation tiles: big, but keep >= 2 row tiles so v7x's 2 TCs both work."""
    tm_cap = 1024
    if n_pad >= 256:
        tm_cap = min(tm_cap, n_pad // 2)
    tm = _pick_tile(n_pad, tm_cap)
    tk = _pick_tile(n_pad, 2048)
    return tm, tk


# ----------------------------------------------------------------------------- kernels
def _proj_kernel(x_ref, wl_ref, wr_ref, b_ref, y_ref, z_ref):
    """Per-row-tile projections: Y = X @ W_l, Z = X @ W_r + b (both stored bf16)."""
    xb = x_ref[...].astype(jnp.bfloat16)
    y = jnp.dot(xb, wl_ref[...], preferred_element_type=jnp.float32)
    z = jnp.dot(xb, wr_ref[...], preferred_element_type=jnp.float32) + b_ref[...]
    y_ref[...] = y.astype(y_ref.dtype)
    z_ref[...] = z.astype(z_ref.dtype)


def _agg_kernel(a_ref, y_ref, z_ref, d_ref, o_ref, *scratch, epilogue, num_valid):
    """Tiled aggregation acc += A_tile @ Y_tile, fused 1/deg + bias + epilogue at last k.

    If no scratch is passed (f32 output), the resident output block is the
    accumulator (P3); otherwise an f32 VMEM scratch is used and the bf16 output
    is written only once at the end.
    """
    acc_ref = scratch[0] if scratch else o_ref
    k = pl.program_id(1)

    @pl.when(k == 0)
    def _():
        acc_ref[...] = jnp.zeros_like(acc_ref)

    a = a_ref[...].astype(jnp.bfloat16)  # int8 edge counts -> bf16 for the MXU
    acc_ref[...] += jnp.dot(a, y_ref[...], preferred_element_type=jnp.float32)

    @pl.when(k == pl.num_programs(1) - 1)
    def _():
        # Exact f32 mean: (sum_j A_ij * y_j) * (1/deg_i), then self path + bias.
        out = acc_ref[...] * d_ref[...] + z_ref[...].astype(jnp.float32)
        if epilogue == "relu":
            out = jnp.maximum(out, 0.0)
        else:  # masked log_softmax over the first `num_valid` (real) classes
            mask = lax.broadcasted_iota(jnp.int32, out.shape, 1) < num_valid
            xm = jnp.where(mask, out, -jnp.inf)
            m = jnp.max(xm, axis=1, keepdims=True)
            s = xm - m
            lse = jnp.log(jnp.sum(jnp.exp(s), axis=1, keepdims=True))
            out = jnp.where(mask, s - lse, 0.0)
        o_ref[...] = out.astype(o_ref.dtype)


# ----------------------------------------------------------------------------- wrappers
def sage_layer(a_i8, inv_deg, x, w_l, w_r, b, *, epilogue, num_valid, out_dtype):
    """One SAGEConv layer (+ fused ReLU or log_softmax). All shapes pre-padded."""
    n_pad, c_in = x.shape
    c_out = w_l.shape[1]

    # ---- stage 1: projections Y = X @ W_l, Z = X @ W_r + b (bf16 outputs) ----
    tmp = _pick_tile(n_pad, 512)
    y, z = pl.pallas_call(
        _proj_kernel,
        out_shape=(
            jax.ShapeDtypeStruct((n_pad, c_out), jnp.bfloat16),
            jax.ShapeDtypeStruct((n_pad, c_out), jnp.bfloat16),
        ),
        grid=(n_pad // tmp,),
        in_specs=[
            pl.BlockSpec((tmp, c_in), lambda i: (i, 0)),
            pl.BlockSpec((c_in, c_out), lambda i: (0, 0)),
            pl.BlockSpec((c_in, c_out), lambda i: (0, 0)),
            pl.BlockSpec((1, c_out), lambda i: (0, 0)),
        ],
        out_specs=(
            pl.BlockSpec((tmp, c_out), lambda i: (i, 0)),
            pl.BlockSpec((tmp, c_out), lambda i: (i, 0)),
        ),
        compiler_params=pltpu.CompilerParams(dimension_semantics=("parallel",)),
    )(x, w_l, w_r, b)

    # ---- stage 2: tiled aggregation A @ Y with fused epilogue ----
    tm, tk = _agg_tiles(n_pad)
    use_scratch = jnp.dtype(out_dtype) != jnp.dtype(jnp.float32)
    out_bytes = jnp.dtype(out_dtype).itemsize
    kernel = functools.partial(_agg_kernel, epilogue=epilogue, num_valid=num_valid)

    # Advisory cost estimate (A at int8, Y re-read once per row tile).
    flops = 2 * n_pad * n_pad * c_out
    transcendentals = n_pad * c_out if epilogue == "log_softmax" else 0
    bytes_accessed = (
        n_pad * n_pad * 1                          # A (int8), streamed once
        + (n_pad // tm) * n_pad * c_out * 2        # Y (bf16), re-read per row tile
        + n_pad * c_out * 2                        # Z (bf16)
        + n_pad * 4                                # inv_deg (f32)
        + n_pad * c_out * out_bytes                # output write
    )

    # Per-generation-safe VMEM budget: double-buffered inputs/outputs + scratch,
    # with headroom, clamped to <= 40 MiB (fits v5e/v6e 128 MiB and v7x 64 MiB).
    vmem_bytes = (
        2 * tm * tk * 1
        + 2 * tk * c_out * 2
        + 2 * tm * c_out * 2
        + 2 * tm * 128 * 4                         # inv_deg tile, lane-padded
        + 2 * tm * c_out * out_bytes
        + (tm * c_out * 4 if use_scratch else 0)
    )
    vmem_limit = int(min(max(vmem_bytes + (8 << 20), 16 << 20), 40 << 20))

    return pl.pallas_call(
        kernel,
        out_shape=jax.ShapeDtypeStruct((n_pad, c_out), out_dtype),
        grid=(n_pad // tm, n_pad // tk),
        in_specs=[
            pl.BlockSpec((tm, tk), lambda i, k: (i, k)),      # A tile (int8, streamed)
            pl.BlockSpec((tk, c_out), lambda i, k: (k, 0)),   # Y tile (bf16)
            pl.BlockSpec((tm, c_out), lambda i, k: (i, 0)),   # Z tile (resident over k)
            pl.BlockSpec((tm, 1), lambda i, k: (i, 0)),       # 1/deg row scale (f32)
        ],
        out_specs=pl.BlockSpec((tm, c_out), lambda i, k: (i, 0)),
        scratch_shapes=(
            [pltpu.VMEM((tm, c_out), jnp.float32)] if use_scratch else []
        ),
        compiler_params=pltpu.CompilerParams(
            dimension_semantics=("parallel", "arbitrary"),
            vmem_limit_bytes=vmem_limit),
        cost_estimate=pl.CostEstimate(
            flops=flops, transcendentals=transcendentals,
            bytes_accessed=bytes_accessed),
    )(a_i8, y, z, inv_deg)


def build_adj(edge_index, num_nodes, n_pad):
    """Dense edge-count adjacency (int8) + exact f32 1/deg row scale, zero-padded.

    int8 holds edge multiplicity; >127 duplicate (dst, src) edges would overflow.
    Zero-degree / padded rows get inv_deg = 0 (matches PyG mean aggregation).
    """
    src, dst = edge_index[0], edge_index[1]
    a = jnp.zeros((n_pad, n_pad), jnp.float32).at[dst, src].add(1.0)
    deg = jnp.sum(a, axis=1, keepdims=True)
    inv_deg = jnp.where(deg > 0.0, 1.0 / jnp.maximum(deg, 1.0), 0.0)
    return a.astype(jnp.int8), inv_deg.astype(jnp.float32)


def sage_forward(x, edge_index, params, num_layers, num_classes):
    n, c_in = x.shape
    n_pad = _round_up(max(n, 8), 128)
    c_in_pad = _round_up(c_in, 128)
    h = jnp.zeros((n_pad, c_in_pad), jnp.float32).at[:n, :c_in].set(x)
    a_i8, inv_deg = build_adj(edge_index, n, n_pad)
    for i, (w_l, w_r, b) in enumerate(params):
        last = i == num_layers - 1
        h = sage_layer(
            a_i8, inv_deg, h, w_l, w_r, b,
            epilogue="log_softmax" if last else "relu",
            num_valid=num_classes,
            out_dtype=jnp.float32 if last else jnp.bfloat16,
        )
        # F.dropout(p=0.3) is identity in eval mode — nothing to do.
    return h[:n, :num_classes]


def init_params(key, in_channels, hidden_channels, num_classes, num_layers):
    """Weights padded (zero-fill) to 128-multiple channel dims; W in bf16, b in f32."""
    params = []
    keys = jax.random.split(key, num_layers * 3)
    for i in range(num_layers):
        c_in = in_channels if i == 0 else hidden_channels
        c_out = num_classes if i == num_layers - 1 else hidden_channels
        c_in_p = _round_up(c_in, 128)
        c_out_p = _round_up(c_out, 128)
        w_l = jax.random.normal(keys[3 * i + 0], (c_in, c_out), jnp.float32) * 0.1
        w_r = jax.random.normal(keys[3 * i + 1], (c_in, c_out), jnp.float32) * 0.1
        b = jax.random.normal(keys[3 * i + 2], (c_out,), jnp.float32) * 0.1
        w_l_p = jnp.zeros((c_in_p, c_out_p), jnp.bfloat16).at[:c_in, :c_out].set(
            w_l.astype(jnp.bfloat16))
        w_r_p = jnp.zeros((c_in_p, c_out_p), jnp.bfloat16).at[:c_in, :c_out].set(
            w_r.astype(jnp.bfloat16))
        b_p = jnp.zeros((1, c_out_p), jnp.float32).at[0, :c_out].set(b)
        params.append((w_l_p, w_r_p, b_p))
    return params


if __name__ == "__main__":
    key = jax.random.PRNGKey(0)
    num_nodes, num_edges = 32, 64
    in_channels, hidden_channels, num_classes, num_layers = 16, 32, 8, 2

    k_x, k_e, k_w = jax.random.split(key, 3)
    x = jax.random.normal(k_x, (num_nodes, in_channels), jnp.float32)
    edge_index = jax.random.randint(k_e, (2, num_edges), 0, num_nodes, jnp.int32)

    params = init_params(k_w, in_channels, hidden_channels, num_classes, num_layers)

    out = sage_forward(x, edge_index, params, num_layers, num_classes)
    jax.block_until_ready(out)
    assert out.shape == (num_nodes, num_classes)
    assert bool(jnp.all(jnp.isfinite(out)))
    print("KERNEL_OK")
</pallas_src>

<mosaic_0001>
module attributes {stable_mosaic.version = 11 : i64} {
  func.func @_proj_kernel(%arg0: i32, %arg1: memref<128x128xf32, #tpu.memory_space<vmem>>, %arg2: memref<128x128xbf16, #tpu.memory_space<vmem>>, %arg3: memref<128x128xbf16, #tpu.memory_space<vmem>>, %arg4: memref<1x128xf32, #tpu.memory_space<vmem>>, %arg5: memref<128x128xbf16, #tpu.memory_space<vmem>>, %arg6: memref<128x128xbf16, #tpu.memory_space<vmem>>) attributes {dimension_semantics = [#tpu.dimension_semantics<parallel>], iteration_bounds = array<i64: 1>, scalar_prefetch = 0 : i64, scratch_operands = 0 : i64, tpu.core_type = #tpu.core_type<tc>, window_params = [{transform_indices = @transform_0, window_bounds = array<i64: 128, 128>}, {pipeline_mode = #tpu.pipeline_mode<synchronous>, transform_indices = @transform_1, window_bounds = array<i64: 128, 128>}, {pipeline_mode = #tpu.pipeline_mode<synchronous>, transform_indices = @transform_2, window_bounds = array<i64: 128, 128>}, {pipeline_mode = #tpu.pipeline_mode<synchronous>, transform_indices = @transform_3, window_bounds = array<i64: 1, 128>}, {transform_indices = @transform_4, window_bounds = array<i64: 128, 128>}, {transform_indices = @transform_5, window_bounds = array<i64: 128, 128>}]} {
    %c0 = arith.constant 0 : index
    %c0_0 = arith.constant 0 : index
    %0 = vector.load %arg1[%c0, %c0_0] : memref<128x128xf32, #tpu.memory_space<vmem>>, vector<128x128xf32>
    %1 = arith.truncf %0 : vector<128x128xf32> to vector<128x128xbf16>
    %c0_1 = arith.constant 0 : index
    %c0_2 = arith.constant 0 : index
    %2 = vector.load %arg2[%c0_1, %c0_2] : memref<128x128xbf16, #tpu.memory_space<vmem>>, vector<128x128xbf16>
    %cst = arith.constant dense<0.000000e+00> : vector<128x128xf32>
    %3 = tpu.matmul %1, %2, %cst {dimension_numbers = #tpu.dot_dimension_numbers<[1], [0], [0], [1], [0, 0, 1, 1], [], []>} : vector<128x128xbf16>, vector<128x128xbf16>, vector<128x128xf32> -> vector<128x128xf32>
    %c0_3 = arith.constant 0 : index
    %c0_4 = arith.constant 0 : index
    %4 = vector.load %arg3[%c0_3, %c0_4] : memref<128x128xbf16, #tpu.memory_space<vmem>>, vector<128x128xbf16>
    %cst_5 = arith.constant dense<0.000000e+00> : vector<128x128xf32>
    %5 = tpu.matmul %1, %4, %cst_5 {dimension_numbers = #tpu.dot_dimension_numbers<[1], [0], [0], [1], [0, 0, 1, 1], [], []>} : vector<128x128xbf16>, vector<128x128xbf16>, vector<128x128xf32> -> vector<128x128xf32>
    %c0_6 = arith.constant 0 : index
    %c0_7 = arith.constant 0 : index
    %6 = vector.load %arg4[%c0_6, %c0_7] : memref<1x128xf32, #tpu.memory_space<vmem>>, vector<1x128xf32>
    %7 = vector.broadcast %6 : vector<1x128xf32> to vector<128x128xf32>
    %8 = arith.addf %5, %7 : vector<128x128xf32>
    %9 = arith.truncf %3 : vector<128x128xf32> to vector<128x128xbf16>
    %c0_8 = arith.constant 0 : index
    %c0_9 = arith.constant 0 : index
    %10 = vector.load %arg5[%c0_8, %c0_9] : memref<128x128xbf16, #tpu.memory_space<vmem>>, vector<128x128xbf16>
    tpu.vector_store %arg5[%c0_8, %c0_9], %9 {strides = array<i32>} : memref<128x128xbf16, #tpu.memory_space<vmem>>, vector<128x128xbf16>,
    %11 = arith.truncf %8 : vector<128x128xf32> to vector<128x128xbf16>
    %c0_10 = arith.constant 0 : index
    %c0_11 = arith.constant 0 : index
    %12 = vector.load %arg6[%c0_10, %c0_11] : memref<128x128xbf16, #tpu.memory_space<vmem>>, vector<128x128xbf16>
    tpu.vector_store %arg6[%c0_10, %c0_11], %11 {strides = array<i32>} : memref<128x128xbf16, #tpu.memory_space<vmem>>, vector<128x128xbf16>,
    return
  }
  func.func @transform_0(%arg0: i32) -> (i32, i32) {
    %c0_i32 = arith.constant 0 : i32
    %c0_i32_0 = arith.constant 0 : i32
    return %arg0, %c0_i32 : i32, i32
  }
  func.func @transform_1(%arg0: i32) -> (i32, i32) {
    %c0_i32 = arith.constant 0 : i32
    %c0_i32_0 = arith.constant 0 : i32
    %c0_i32_1 = arith.constant 0 : i32
    return %c0_i32, %c0_i32_0 : i32, i32
  }
  func.func @transform_2(%arg0: i32) -> (i32, i32) {
    %c0_i32 = arith.constant 0 : i32
    %c0_i32_0 = arith.constant 0 : i32
    %c0_i32_1 = arith.constant 0 : i32
    return %c0_i32, %c0_i32_0 : i32, i32
  }
  func.func @transform_3(%arg0: i32) -> (i32, i32) {
    %c0_i32 = arith.constant 0 : i32
    %c0_i32_0 = arith.constant 0 : i32
    %c0_i32_1 = arith.constant 0 : i32
    return %c0_i32, %c0_i32_0 : i32, i32
  }
  func.func @transform_4(%arg0: i32) -> (i32, i32) {
    %c0_i32 = arith.constant 0 : i32
    %c0_i32_0 = arith.constant 0 : i32
    return %arg0, %c0_i32 : i32, i32
  }
  func.func @transform_5(%arg0: i32) -> (i32, i32) {
    %c0_i32 = arith.constant 0 : i32
    %c0_i32_0 = arith.constant 0 : i32
    return %arg0, %c0_i32 : i32, i32
  }
}

</mosaic_0001>

<llo_original>
// kernel: tpu_custom_call.1
$region0: #{tpu_custom_call.1}
  #allocation0 [shape = 'u32[]', space=smem, size = 0x4, offset = 0x4, fixed_abs, tag = 'smem constant byte address 0x4 - core index']
  #allocation1 [shape = 'u32[144,128]{1,0:T(1,128)}', space=vmem, size = 0x12000, scoped, tag = 'internal scratch']
  %s0 = inlined_call_operand.hbm [shape: f32[128,128], index: 0, kind: input, shape index: {}]
  %s1 = inlined_call_operand.hbm [shape: bf16[128,128], index: 1, kind: input, shape index: {}]
  %s2 = inlined_call_operand.hbm [shape: bf16[128,128], index: 2, kind: input, shape index: {}]
  %s3 = inlined_call_operand.vmem [shape: f32[1,128], index: 3, kind: input, shape index: {}]
  %s4 = inlined_call_operand.hbm [shape: bf16[128,128], index: 4, kind: output, shape index: {0}]
  %s5 = inlined_call_operand.hbm [shape: bf16[128,128], index: 5, kind: output, shape index: {1}]
  %6 = xla_tuple %s4, %s5
  %s7 = sld [smem:[#allocation0]]
  $region46: #{tpu_custom_call.1} parent=0
    _
  %s9 = ssub.s32 1, %s7
  %s10 = scalar_select 0, %s9, %s7
  $region1: #{tpu_custom_call.1} parent=0
    #allocation2 [shape = 'u8[65536]{0}', space=vmem, size = 0x10000, scoped, tag = 'input window, operand 0, single buffered']
    #allocation3 [shape = 's32[1]{0}', space=sflag, size = 0x4, scoped, tag = 'scoped memory for tpu_custom_call.1']
    #allocation4 [shape = 's32[1]{0}', space=sflag, size = 0x4, scoped, tag = 'scoped memory for tpu_custom_call.1']
    #allocation5 [shape = 'u8[32768]{0}', space=vmem, size = 0x8000, scoped, tag = 'input window, operand 1, single buffered']
    #allocation6 [shape = 's32[1]{0}', space=sflag, size = 0x4, scoped, tag = 'scoped memory for tpu_custom_call.1']
    #allocation7 [shape = 'u8[32768]{0}', space=vmem, size = 0x8000, scoped, tag = 'input window, operand 2, single buffered']
    #allocation8 [shape = 'u8[32768]{0}', space=vmem, size = 0x8000, scoped, tag = 'output window, operand 0, single buffered']
    #allocation9 [shape = 'u8[32768]{0}', space=vmem, size = 0x8000, scoped, tag = 'output window, operand 1, single buffered']
    #allocation10 [shape = 's32[1]{0}', space=sflag, size = 0x4, scoped, tag = 'scoped memory for tpu_custom_call.1']
    %11 = vsyncpa [#allocation3], 0
    %12 = vsyncpa [#allocation6], 0
    %13 = vsyncpa [#allocation4], 0
    %14 = vsyncpa [#allocation10], 0
    // Predicated region
    $region2: #{tpu_custom_call.1} parent=1 // pred_check
      _
    $region3: #{tpu_custom_call.1} parent=1 // pred_check_branch
      %16 = sbr.rel (0) target = $region5
    $region4: #{tpu_custom_call.1} parent=1 // pred_region
      %s18 = ssub.s32 2048, 2048
      %19 = vsyncadd [#allocation3], %s18
      %s20 = sshll.u32 [#allocation2], 4
      %s21 = int_to_ptr.vmem [resolvable:$true] %s20
      %26 = dma.hbm_to_vmem [thread:$0]  %s0, 2048, %s21, [#allocation3], 128, 128, 8
    $region5: #{tpu_custom_call.1} parent=1 // pred_fallthru
      _
    // Predicated region
    $region6: #{tpu_custom_call.1} parent=1 // pred_check
      _
    $region7: #{tpu_custom_call.1} parent=1 // pred_check_branch
      %28 = sbr.rel (0) target = $region9
    $region8: #{tpu_custom_call.1} parent=1 // pred_region
      %s30 = ssub.s32 1024, 1024
      %31 = vsyncadd [#allocation6], %s30
      %s32 = sshll.u32 [#allocation5], 4
      %s33 = int_to_ptr.vmem [resolvable:$true] %s32
      %38 = dma.hbm_to_vmem [thread:$0]  %s1, 1024, %s33, [#allocation6], 64, 64, 4
    $region9: #{tpu_custom_call.1} parent=1 // pred_fallthru
      _
    // Predicated region
    $region10: #{tpu_custom_call.1} parent=1 // pred_check
      _
    $region11: #{tpu_custom_call.1} parent=1 // pred_check_branch
      %40 = sbr.rel (0) target = $region13
    $region12: #{tpu_custom_call.1} parent=1 // pred_region
      %s42 = ssub.s32 1024, 1024
      %43 = vsyncadd [#allocation6], %s42
      %s44 = sshll.u32 [#allocation7], 4
      %s45 = int_to_ptr.vmem [resolvable:$true] %s44
      %50 = dma.hbm_to_vmem [thread:$0]  %s2, 1024, %s45, [#allocation6], 64, 64, 4
    $region13: #{tpu_custom_call.1} parent=1 // pred_fallthru
      _
    // Predicated region
    $region14: #{tpu_custom_call.1} parent=1 // pred_check
      _
    $region15: #{tpu_custom_call.1} parent=1 // pred_check_branch
      %52 = sbr.rel (0) target = $region17
    $region16: #{tpu_custom_call.1} parent=1 // pred_region
      _
    $region17: #{tpu_custom_call.1} parent=1 // pred_fallthru
      _
    // Predicated region
    $region18: #{tpu_custom_call.1} parent=1 // pred_check
      _
    $region19: #{tpu_custom_call.1} parent=1 // pred_check_branch
      %54 = sbr.rel (0) target = $region21
    $region20: #{tpu_custom_call.1} parent=1 // pred_region
      %55 = dma.done [#allocation3], 2048
    $region21: #{tpu_custom_call.1} parent=1 // pred_fallthru
      _
    // Predicated region
    $region22: #{tpu_custom_call.1} parent=1 // pred_check
      _
    $region23: #{tpu_custom_call.1} parent=1 // pred_check_branch
      %57 = sbr.rel (0) target = $region25
    $region24: #{tpu_custom_call.1} parent=1 // pred_region
      %58 = dma.done [#allocation6], 1024
    $region25: #{tpu_custom_call.1} parent=1 // pred_fallthru
      _
    // Predicated region
    $region26: #{tpu_custom_call.1} parent=1 // pred_check
      _
    $region27: #{tpu_custom_call.1} parent=1 // pred_check_branch
      %60 = sbr.rel (0) target = $region29
    $region28: #{tpu_custom_call.1} parent=1 // pred_region
      %61 = dma.done [#allocation6], 1024
    $region29: #{tpu_custom_call.1} parent=1 // pred_fallthru
      _
    %v63 = vld [vmem:[#allocation2] sm:$0xff]
    %v64 = vld [vmem:[#allocation2 + $0x8] sm:$0xff]
    %v65 = vld [vmem:[#allocation2 + $0x10] sm:$0xff]
    %v66 = vld [vmem:[#allocation2 + $0x18] sm:$0xff]
    %v67 = vld [vmem:[#allocation2 + $0x20] sm:$0xff]
    %v68 = vld [vmem:[#allocation2 + $0x28] sm:$0xff]
    %v69 = vld [vmem:[#allocation2 + $0x30] sm:$0xff]
    %v70 = vld [vmem:[#allocation2 + $0x38] sm:$0xff]
    %v71 = vld [vmem:[#allocation2 + $0x40] sm:$0xff]
    %v72 = vld [vmem:[#allocation2 + $0x48] sm:$0xff]
    %v73 = vld [vmem:[#allocation2 + $0x50] sm:$0xff]
    %v74 = vld [vmem:[#allocation2 + $0x58] sm:$0xff]
    %v75 = vld [vmem:[#allocation2 + $0x60] sm:$0xff]
    %v76 = vld [vmem:[#allocation2 + $0x68] sm:$0xff]
    %v77 = vld [vmem:[#allocation2 + $0x70] sm:$0xff]
    %v78 = vld [vmem:[#allocation2 + $0x78] sm:$0xff]
    %v79 = vpack.c.bf16 %v64, %v63
    %v80 = vpack.c.bf16 %v66, %v65
    %v81 = vpack.c.bf16 %v68, %v67
    %v82 = vpack.c.bf16 %v70, %v69
    %v83 = vpack.c.bf16 %v72, %v71
    %v84 = vpack.c.bf16 %v74, %v73
    %v85 = vpack.c.bf16 %v76, %v75
    %v86 = vpack.c.bf16 %v78, %v77
    %v87 = vld [vmem:[#allocation5] sm:$0xf]
    %v88 = vld [vmem:[#allocation5 + $0x4] sm:$0xf]
    %v89 = vld [vmem:[#allocation5 + $0x8] sm:$0xf]
    %v90 = vld [vmem:[#allocation5 + $0xc] sm:$0xf]
    %v91 = vld [vmem:[#allocation5 + $0x10] sm:$0xf]
    %v92 = vld [vmem:[#allocation5 + $0x14] sm:$0xf]
    %v93 = vld [vmem:[#allocation5 + $0x18] sm:$0xf]
    %v94 = vld [vmem:[#allocation5 + $0x1c] sm:$0xf]
    %v95 = vld [vmem:[#allocation5 + $0x20] sm:$0xf]
    %v96 = vld [vmem:[#allocation5 + $0x24] sm:$0xf]
    %v97 = vld [vmem:[#allocation5 + $0x28] sm:$0xf]
    %v98 = vld [vmem:[#allocation5 + $0x2c] sm:$0xf]
    %v99 = vld [vmem:[#allocation5 + $0x30] sm:$0xf]
    %v100 = vld [vmem:[#allocation5 + $0x34] sm:$0xf]
    %v101 = vld [vmem:[#allocation5 + $0x38] sm:$0xf]
    %v102 = vld [vmem:[#allocation5 + $0x3c] sm:$0xf]
    %v119 = vunpack.c.l.b16 %v87
    %v120 = vunpack.c.l.b16 %v88
    %v121 = vunpack.c.l.b16 %v89
    %v122 = vunpack.c.l.b16 %v90
    %v123 = vunpack.c.l.b16 %v91
    %v124 = vunpack.c.l.b16 %v92
    %v125 = vunpack.c.l.b16 %v93
    %v126 = vunpack.c.l.b16 %v94
    %v127 = vunpack.c.l.b16 %v95
    %v128 = vunpack.c.l.b16 %v96
    %v129 = vunpack.c.l.b16 %v97
    %v130 = vunpack.c.l.b16 %v98
    %v131 = vunpack.c.l.b16 %v99
    %v132 = vunpack.c.l.b16 %v100
    %v133 = vunpack.c.l.b16 %v101
    %v134 = vunpack.c.l.b16 %v102
    %v135 = vpack.c.b16 %v120, %v119
    %v136 = vpack.c.b16 %v122, %v121
    %v137 = vpack.c.b16 %v124, %v123
    %v138 = vpack.c.b16 %v126, %v125
    %v139 = vpack.c.b16 %v128, %v127
    %v140 = vpack.c.b16 %v130, %v129
    %v141 = vpack.c.b16 %v132, %v131
    %v142 = vpack.c.b16 %v134, %v133
    %151 = vmatprep.subr.bf16.mxu0 0
    %152 = vmatpush1.bf16.msra.mxu0 %v142
    %153 = vmatprep.subr.bf16.mxu0 0
    %154 = vmatpush1.bf16.msra.mxu0 %v141
    %155 = vmatprep.subr.bf16.mxu0 0
    %156 = vmatpush1.bf16.msra.mxu0 %v140
    %157 = vmatprep.subr.bf16.mxu0 0
    %158 = vmatpush1.bf16.msra.mxu0 %v139
    %159 = vmatprep.subr.bf16.mxu0 0
    %160 = vmatpush1.bf16.msra.mxu0 %v138
    %161 = vmatprep.subr.bf16.mxu0 0
    %162 = vmatpush1.bf16.msra.mxu0 %v137
    %163 = vmatprep.subr.bf16.mxu0 0
    %164 = vmatpush1.bf16.msra.mxu0 %v136
    %165 = vmatprep.subr.bf16.mxu0 0
    %166 = vmatpush1.bf16.msra.mxu0 %v135
    %167 = vmatprep.subr.bf16.mxu0 0
    %168 = vmatpush2.bf16.msra.mxu0 0
    %169 = vmatprep.subr.bf16.mxu0 0
    %170 = vmatpush2.bf16.msra.mxu0 0
    %171 = vmatprep.subr.bf16.mxu0 0
    %172 = vmatpush2.bf16.msra.mxu0 0
    %173 = vmatprep.subr.bf16.mxu0 0
    %174 = vmatpush2.bf16.msra.mxu0 0
    %175 = vmatprep.subr.bf16.mxu0 0
    %176 = vmatpush2.bf16.msra.mxu0 0
    %177 = vmatprep.subr.bf16.mxu0 0
    %178 = vmatpush2.bf16.msra.mxu0 0
    %179 = vmatprep.subr.bf16.mxu0 0
    %180 = vmatpush2.bf16.msra.mxu0 0
    %181 = vmatprep.subr.bf16.mxu0 0
    %182 = vmatpush2.bf16.msra.mxu0 0
    %183 = vmatprep.mubr.bf16.mxu0 0
    %184 = vmatmul.mubr.bf16.gmra.mxu0 %v79
    %v185 = vpop.f32.mrf.mxu0
    %v186 = vadd.f32 0.0, %v185
    %v187 = vpop.f32.mrf.mxu0
    %v188 = vpop.f32.mrf.mxu0
    %v189 = vadd.f32 0.0, %v188
    %v190 = vpop.f32.mrf.mxu0
    %191 = vmatprep.mubr.bf16.mxu0 0
    %192 = vmatmul.mubr.bf16.gmra.mxu0 %v80
    %v193 = vpop.f32.mrf.mxu0
    %v194 = vadd.f32 0.0, %v193
    %v195 = vpop.f32.mrf.mxu0
    %v196 = vpop.f32.mrf.mxu0
    %v197 = vadd.f32 0.0, %v196
    %v198 = vpop.f32.mrf.mxu0
    %199 = vmatprep.mubr.bf16.mxu0 0
    %200 = vmatmul.mubr.bf16.gmra.mxu0 %v81
    %v201 = vpop.f32.mrf.mxu0
    %v202 = vadd.f32 0.0, %v201
    %v203 = vpop.f32.mrf.mxu0
    %v204 = vpop.f32.mrf.mxu0
    %v205 = vadd.f32 0.0, %v204
    %v206 = vpop.f32.mrf.mxu0
    %207 = vmatprep.mubr.bf16.mxu0 0
    %208 = vmatmul.mubr.bf16.gmra.mxu0 %v82
    %v209 = vpop.f32.mrf.mxu0
    %v210 = vadd.f32 0.0, %v209
    %v211 = vpop.f32.mrf.mxu0
    %v212 = vpop.f32.mrf.mxu0
    %v213 = vadd.f32 0.0, %v212
    %v214 = vpop.f32.mrf.mxu0
    %215 = vmatprep.mubr.bf16.mxu0 0
    %216 = vmatmul.mubr.bf16.gmra.mxu0 %v83
    %v217 = vpop.f32.mrf.mxu0
    %v218 = vadd.f32 0.0, %v217
    %v219 = vpop.f32.mrf.mxu0
    %v220 = vpop.f32.mrf.mxu0
    %v221 = vadd.f32 0.0, %v220
    %v222 = vpop.f32.mrf.mxu0
    %223 = vmatprep.mubr.bf16.mxu0 0
    %224 = vmatmul.mubr.bf16.gmra.mxu0 %v84
    %v225 = vpop.f32.mrf.mxu0
    %v226 = vadd.f32 0.0, %v225
    %v227 = vpop.f32.mrf.mxu0
    %v228 = vpop.f32.mrf.mxu0
    %v229 = vadd.f32 0.0, %v228
    %v230 = vpop.f32.mrf.mxu0
    %231 = vmatprep.mubr.bf16.mxu0 0
    %232 = vmatmul.mubr.bf16.gmra.mxu0 %v85
    %v233 = vpop.f32.mrf.mxu0
    %v234 = vadd.f32 0.0, %v233
    %v235 = vpop.f32.mrf.mxu0
    %v236 = vpop.f32.mrf.mxu0
    %v237 = vadd.f32 0.0, %v236
    %v238 = vpop.f32.mrf.mxu0
    %239 = vmatprep.mubr.bf16.mxu0 0
    %240 = vmatmul.mubr.bf16.gmra.mxu0 %v86
    %v241 = vpop.f32.mrf.mxu0
    %v242 = vadd.f32 0.0, %v241
    %v243 = vpop.f32.mrf.mxu0
    %v244 = vpop.f32.mrf.mxu0
    %v245 = vadd.f32 0.0, %v244
    %v246 = vpop.f32.mrf.mxu0
    %247 = vdwg.mxu0
    %v248 = vld [vmem:[#allocation7] sm:$0xf]
    %v249 = vld [vmem:[#allocation7 + $0x4] sm:$0xf]
    %v250 = vld [vmem:[#allocation7 + $0x8] sm:$0xf]
    %v251 = vld [vmem:[#allocation7 + $0xc] sm:$0xf]
    %v252 = vld [vmem:[#allocation7 + $0x10] sm:$0xf]
    %v253 = vld [vmem:[#allocation7 + $0x14] sm:$0xf]
    %v254 = vld [vmem:[#allocation7 + $0x18] sm:$0xf]
    %v255 = vld [vmem:[#allocation7 + $0x1c] sm:$0xf]
    %v256 = vld [vmem:[#allocation7 + $0x20] sm:$0xf]
    %v257 = vld [vmem:[#allocation7 + $0x24] sm:$0xf]
    %v258 = vld [vmem:[#allocation7 + $0x28] sm:$0xf]
    %v259 = vld [vmem:[#allocation7 + $0x2c] sm:$0xf]
    %v260 = vld [vmem:[#allocation7 + $0x30] sm:$0xf]
    %v261 = vld [vmem:[#allocation7 + $0x34] sm:$0xf]
    %v262 = vld [vmem:[#allocation7 + $0x38] sm:$0xf]
    %v263 = vld [vmem:[#allocation7 + $0x3c] sm:$0xf]
    %v264 = vld [vmem:[%s3] sm:$0x1]
    %v266 = vlaneseq
    %v267 = vshrl.u32 %v266, 7
    %v268 = vsub.s32 0, %v267
    %v269 = vrot.slane %v264, %v268
    %v287 = vunpack.c.l.b16 %v248
    %v288 = vunpack.c.l.b16 %v249
    %v289 = vunpack.c.l.b16 %v250
    %v290 = vunpack.c.l.b16 %v251
    %v291 = vunpack.c.l.b16 %v252
    %v292 = vunpack.c.l.b16 %v253
    %v293 = vunpack.c.l.b16 %v254
    %v294 = vunpack.c.l.b16 %v255
    %v295 = vunpack.c.l.b16 %v256
    %v296 = vunpack.c.l.b16 %v257
    %v297 = vunpack.c.l.b16 %v258
    %v298 = vunpack.c.l.b16 %v259
    %v299 = vunpack.c.l.b16 %v260
    %v300 = vunpack.c.l.b16 %v261
    %v301 = vunpack.c.l.b16 %v262
    %v302 = vunpack.c.l.b16 %v263
    %v303 = vpack.c.b16 %v288, %v287
    %v304 = vpack.c.b16 %v290, %v289
    %v305 = vpack.c.b16 %v292, %v291
    %v306 = vpack.c.b16 %v294, %v293
    %v307 = vpack.c.b16 %v296, %v295
    %v308 = vpack.c.b16 %v298, %v297
    %v309 = vpack.c.b16 %v300, %v299
    %v310 = vpack.c.b16 %v302, %v301
    %319 = vmatprep.subr.bf16.mxu0 0
    %320 = vmatpush1.bf16.msra.mxu0 %v310
    %321 = vmatprep.subr.bf16.mxu0 0
    %322 = vmatpush1.bf16.msra.mxu0 %v309
    %323 = vmatprep.subr.bf16.mxu0 0
    %324 = vmatpush1.bf16.msra.mxu0 %v308
    %325 = vmatprep.subr.bf16.mxu0 0
    %326 = vmatpush1.bf16.msra.mxu0 %v307
    %327 = vmatprep.subr.bf16.mxu0 0
    %328 = vmatpush1.bf16.msra.mxu0 %v306
    %329 = vmatprep.subr.bf16.mxu0 0
    %330 = vmatpush1.bf16.msra.mxu0 %v305
    %331 = vmatprep.subr.bf16.mxu0 0
    %332 = vmatpush1.bf16.msra.mxu0 %v304
    %333 = vmatprep.subr.bf16.mxu0 0
    %334 = vmatpush1.bf16.msra.mxu0 %v303
    %335 = vmatprep.subr.bf16.mxu0 0
    %336 = vmatpush2.bf16.msra.mxu0 0
    %337 = vmatprep.subr.bf16.mxu0 0
    %338 = vmatpush2.bf16.msra.mxu0 0
    %339 = vmatprep.subr.bf16.mxu0 0
    %340 = vmatpush2.bf16.msra.mxu0 0
    %341 = vmatprep.subr.bf16.mxu0 0
    %342 = vmatpush2.bf16.msra.mxu0 0
    %343 = vmatprep.subr.bf16.mxu0 0
    %344 = vmatpush2.bf16.msra.mxu0 0
    %345 = vmatprep.subr.bf16.mxu0 0
    %346 = vmatpush2.bf16.msra.mxu0 0
    %347 = vmatprep.subr.bf16.mxu0 0
    %348 = vmatpush2.bf16.msra.mxu0 0
    %349 = vmatprep.subr.bf16.mxu0 0
    %350 = vmatpush2.bf16.msra.mxu0 0
    %351 = vmatprep.mubr.bf16.mxu0 0
    %352 = vmatmul.mubr.bf16.gmra.mxu0 %v79
    %v353 = vpop.f32.mrf.mxu0
    %v354 = vadd.f32 %v269, %v353
    %v355 = vpop.f32.mrf.mxu0
    %v356 = vpop.f32.mrf.mxu0
    %v357 = vadd.f32 %v269, %v356
    %v358 = vpop.f32.mrf.mxu0
    %359 = vmatprep.mubr.bf16.mxu0 0
    %360 = vmatmul.mubr.bf16.gmra.mxu0 %v80
    %v361 = vpop.f32.mrf.mxu0
    %v362 = vadd.f32 %v269, %v361
    %v363 = vpop.f32.mrf.mxu0
    %v364 = vpop.f32.mrf.mxu0
    %v365 = vadd.f32 %v269, %v364
    %v366 = vpop.f32.mrf.mxu0
    %367 = vmatprep.mubr.bf16.mxu0 0
    %368 = vmatmul.mubr.bf16.gmra.mxu0 %v81
    %v369 = vpop.f32.mrf.mxu0
    %v370 = vadd.f32 %v269, %v369
    %v371 = vpop.f32.mrf.mxu0
    %v372 = vpop.f32.mrf.mxu0
    %v373 = vadd.f32 %v269, %v372
    %v374 = vpop.f32.mrf.mxu0
    %375 = vmatprep.mubr.bf16.mxu0 0
    %376 = vmatmul.mubr.bf16.gmra.mxu0 %v82
    %v377 = vpop.f32.mrf.mxu0
    %v378 = vadd.f32 %v269, %v377
    %v379 = vpop.f32.mrf.mxu0
    %v380 = vpop.f32.mrf.mxu0
    %v381 = vadd.f32 %v269, %v380
    %v382 = vpop.f32.mrf.mxu0
    %383 = vmatprep.mubr.bf16.mxu0 0
    %384 = vmatmul.mubr.bf16.gmra.mxu0 %v83
    %v385 = vpop.f32.mrf.mxu0
    %v386 = vadd.f32 %v269, %v385
    %v387 = vpop.f32.mrf.mxu0
    %v388 = vpop.f32.mrf.mxu0
    %v389 = vadd.f32 %v269, %v388
    %v390 = vpop.f32.mrf.mxu0
    %391 = vmatprep.mubr.bf16.mxu0 0
    %392 = vmatmul.mubr.bf16.gmra.mxu0 %v84
    %v393 = vpop.f32.mrf.mxu0
    %v394 = vadd.f32 %v269, %v393
    %v395 = vpop.f32.mrf.mxu0
    %v396 = vpop.f32.mrf.mxu0
    %v397 = vadd.f32 %v269, %v396
    %v398 = vpop.f32.mrf.mxu0
    %399 = vmatprep.mubr.bf16.mxu0 0
    %400 = vmatmul.mubr.bf16.gmra.mxu0 %v85
    %v401 = vpop.f32.mrf.mxu0
    %v402 = vadd.f32 %v269, %v401
    %v403 = vpop.f32.mrf.mxu0
    %v404 = vpop.f32.mrf.mxu0
    %v405 = vadd.f32 %v269, %v404
    %v406 = vpop.f32.mrf.mxu0
    %407 = vmatprep.mubr.bf16.mxu0 0
    %408 = vmatmul.mubr.bf16.gmra.mxu0 %v86
    %v409 = vpop.f32.mrf.mxu0
    %v410 = vadd.f32 %v269, %v409
    %v411 = vpop.f32.mrf.mxu0
    %v412 = vpop.f32.mrf.mxu0
    %v413 = vadd.f32 %v269, %v412
    %v414 = vpop.f32.mrf.mxu0
    %415 = vdwg.mxu0
    %v416 = vpack.c.bf16 %v189, %v186
    %v417 = vpack.c.bf16 %v197, %v194
    %v418 = vpack.c.bf16 %v205, %v202
    %v419 = vpack.c.bf16 %v213, %v210
    %v420 = vpack.c.bf16 %v221, %v218
    %v421 = vpack.c.bf16 %v229, %v226
    %v422 = vpack.c.bf16 %v237, %v234
    %v423 = vpack.c.bf16 %v245, %v242
    %v432 = vunpack.c.l.b16 %v416
    %v433 = vunpack.c.h.b16 %v416
    %v434 = vunpack.c.l.b16 %v417
    %v435 = vunpack.c.h.b16 %v417
    %v436 = vunpack.c.l.b16 %v418
    %v437 = vunpack.c.h.b16 %v418
    %v438 = vunpack.c.l.b16 %v419
    %v439 = vunpack.c.h.b16 %v419
    %v440 = vunpack.c.l.b16 %v420
    %v441 = vunpack.c.h.b16 %v420
    %v442 = vunpack.c.l.b16 %v421
    %v443 = vunpack.c.h.b16 %v421
    %v444 = vunpack.c.l.b16 %v422
    %v445 = vunpack.c.h.b16 %v422
    %v446 = vunpack.c.l.b16 %v423
    %v447 = vunpack.c.h.b16 %v423
    %v448 = vpack.c.b16 %v432, %v432
    %v449 = vpack.c.b16 %v433, %v433
    %v450 = vpack.c.b16 %v434, %v434
    %v451 = vpack.c.b16 %v435, %v435
    %v452 = vpack.c.b16 %v436, %v436
    %v453 = vpack.c.b16 %v437, %v437
    %v454 = vpack.c.b16 %v438, %v438
    %v455 = vpack.c.b16 %v439, %v439
    %v456 = vpack.c.b16 %v440, %v440
    %v457 = vpack.c.b16 %v441, %v441
    %v458 = vpack.c.b16 %v442, %v442
    %v459 = vpack.c.b16 %v443, %v443
    %v460 = vpack.c.b16 %v444, %v444
    %v461 = vpack.c.b16 %v445, %v445
    %v462 = vpack.c.b16 %v446, %v446
    %v463 = vpack.c.b16 %v447, %v447
    %480 = vst [vmem:[#allocation8] sm:$0xf] %v448
    %481 = vst [vmem:[#allocation8 + $0x4] sm:$0xf] %v449
    %482 = vst [vmem:[#allocation8 + $0x8] sm:$0xf] %v450
    %483 = vst [vmem:[#allocation8 + $0xc] sm:$0xf] %v451
    %484 = vst [vmem:[#allocation8 + $0x10] sm:$0xf] %v452
    %485 = vst [vmem:[#allocation8 + $0x14] sm:$0xf] %v453
    %486 = vst [vmem:[#allocation8 + $0x18] sm:$0xf] %v454
    %487 = vst [vmem:[#allocation8 + $0x1c] sm:$0xf] %v455
    %488 = vst [vmem:[#allocation8 + $0x20] sm:$0xf] %v456
    %489 = vst [vmem:[#allocation8 + $0x24] sm:$0xf] %v457
    %490 = vst [vmem:[#allocation8 + $0x28] sm:$0xf] %v458
    %491 = vst [vmem:[#allocation8 + $0x2c] sm:$0xf] %v459
    %492 = vst [vmem:[#allocation8 + $0x30] sm:$0xf] %v460
    %493 = vst [vmem:[#allocation8 + $0x34] sm:$0xf] %v461
    %494 = vst [vmem:[#allocation8 + $0x38] sm:$0xf] %v462
    %495 = vst [vmem:[#allocation8 + $0x3c] sm:$0xf] %v463
    %v496 = vpack.c.bf16 %v357, %v354
    %v497 = vpack.c.bf16 %v365, %v362
    %v498 = vpack.c.bf16 %v373, %v370
    %v499 = vpack.c.bf16 %v381, %v378
    %v500 = vpack.c.bf16 %v389, %v386
    %v501 = vpack.c.bf16 %v397, %v394
    %v502 = vpack.c.bf16 %v405, %v402
    %v503 = vpack.c.bf16 %v413, %v410
    %v512 = vunpack.c.l.b16 %v496
    %v513 = vunpack.c.h.b16 %v496
    %v514 = vunpack.c.l.b16 %v497
    %v515 = vunpack.c.h.b16 %v497
    %v516 = vunpack.c.l.b16 %v498
    %v517 = vunpack.c.h.b16 %v498
    %v518 = vunpack.c.l.b16 %v499
    %v519 = vunpack.c.h.b16 %v499
    %v520 = vunpack.c.l.b16 %v500
    %v521 = vunpack.c.h.b16 %v500
    %v522 = vunpack.c.l.b16 %v501
    %v523 = vunpack.c.h.b16 %v501
    %v524 = vunpack.c.l.b16 %v502
    %v525 = vunpack.c.h.b16 %v502
    %v526 = vunpack.c.l.b16 %v503
    %v527 = vunpack.c.h.b16 %v503
    %v528 = vpack.c.b16 %v512, %v512
    %v529 = vpack.c.b16 %v513, %v513
    %v530 = vpack.c.b16 %v514, %v514
    %v531 = vpack.c.b16 %v515, %v515
    %v532 = vpack.c.b16 %v516, %v516
    %v533 = vpack.c.b16 %v517, %v517
    %v534 = vpack.c.b16 %v518, %v518
    %v535 = vpack.c.b16 %v519, %v519
    %v536 = vpack.c.b16 %v520, %v520
    %v537 = vpack.c.b16 %v521, %v521
    %v538 = vpack.c.b16 %v522, %v522
    %v539 = vpack.c.b16 %v523, %v523
    %v540 = vpack.c.b16 %v524, %v524
    %v541 = vpack.c.b16 %v525, %v525
    %v542 = vpack.c.b16 %v526, %v526
    %v543 = vpack.c.b16 %v527, %v527
    %560 = vst [vmem:[#allocation9] sm:$0xf] %v528
    %561 = vst [vmem:[#allocation9 + $0x4] sm:$0xf] %v529
    %562 = vst [vmem:[#allocation9 + $0x8] sm:$0xf] %v530
    %563 = vst [vmem:[#allocation9 + $0xc] sm:$0xf] %v531
    %564 = vst [vmem:[#allocation9 + $0x10] sm:$0xf] %v532
    %565 = vst [vmem:[#allocation9 + $0x14] sm:$0xf] %v533
    %566 = vst [vmem:[#allocation9 + $0x18] sm:$0xf] %v534
    %567 = vst [vmem:[#allocation9 + $0x1c] sm:$0xf] %v535
    %568 = vst [vmem:[#allocation9 + $0x20] sm:$0xf] %v536
    %569 = vst [vmem:[#allocation9 + $0x24] sm:$0xf] %v537
    %570 = vst [vmem:[#allocation9 + $0x28] sm:$0xf] %v538
    %571 = vst [vmem:[#allocation9 + $0x2c] sm:$0xf] %v539
    %572 = vst [vmem:[#allocation9 + $0x30] sm:$0xf] %v540
    %573 = vst [vmem:[#allocation9 + $0x34] sm:$0xf] %v541
    %574 = vst [vmem:[#allocation9 + $0x38] sm:$0xf] %v542
    %575 = vst [vmem:[#allocation9 + $0x3c] sm:$0xf] %v543
    // Predicated region
    $region30: #{tpu_custom_call.1} parent=1 // pred_check
      _
    $region31: #{tpu_custom_call.1} parent=1 // pred_check_branch
      %577 = sbr.rel (0) target = $region33
    $region32: #{tpu_custom_call.1} parent=1 // pred_region
      %s579 = ssub.s32 1024, 1024
      %580 = vsyncadd [#allocation4], %s579
      %s581 = sshll.u32 [#allocation8], 4
      %s582 = int_to_ptr.vmem [resolvable:$true] %s581
      %587 = dma.vmem_to_hbm [thread:$0]  %s582, 1024, %s4, [#allocation4], 64, 64, 4
    $region33: #{tpu_custom_call.1} parent=1 // pred_fallthru
      _
    // Predicated region
    $region34: #{tpu_custom_call.1} parent=1 // pred_check
      _
    $region35: #{tpu_custom_call.1} parent=1 // pred_check_branch
      %589 = sbr.rel (0) target = $region37
    $region36: #{tpu_custom_call.1} parent=1 // pred_region
      %s591 = ssub.s32 1024, 1024
      %592 = vsyncadd [#allocation10], %s591
      %s593 = sshll.u32 [#allocation9], 4
      %s594 = int_to_ptr.vmem [resolvable:$true] %s593
      %599 = dma.vmem_to_hbm [thread:$0]  %s594, 1024, %s5, [#allocation10], 64, 64, 4
    $region37: #{tpu_custom_call.1} parent=1 // pred_fallthru
      _
    // Predicated region
    $region38: #{tpu_custom_call.1} parent=1 // pred_check
      _
    $region39: #{tpu_custom_call.1} parent=1 // pred_check_branch
      %601 = sbr.rel (0) target = $region41
    $region40: #{tpu_custom_call.1} parent=1 // pred_region
      %602 = dma.done [#allocation4], 1024
    $region41: #{tpu_custom_call.1} parent=1 // pred_fallthru
      _
    // Predicated region
    $region42: #{tpu_custom_call.1} parent=1 // pred_check
      _
    $region43: #{tpu_custom_call.1} parent=1 // pred_check_branch
      %604 = sbr.rel (0) target = $region45
    $region44: #{tpu_custom_call.1} parent=1 // pred_region
      %605 = dma.done [#allocation10], 1024
    $region45: #{tpu_custom_call.1} parent=1 // pred_fallthru
      _
    %606 = vsyncpa [#allocation3], 1
    %607 = vsyncpa [#allocation6], 1
    %608 = vsyncpa [#allocation4], 1
    %609 = vsyncpa [#allocation10], 1

</llo_original>
